<compile_context>
chip_gen: v7x
topology: tpu7x:2x2x1
jax: 0.10.0
libtpu: 0.0.40
codegen_flags: <defaults>
</compile_context>

<pallas_src>
import jax
import jax.numpy as jnp
from jax.experimental import pallas as pl
from jax.experimental.pallas import tpu as pltpu


def _round_up(x: int, m: int) -> int:
    return ((x + m - 1) // m) * m


def _make_mlp_kernel(n_layers: int, batch_bias: bool, k: int, nx: int):
    """Body refs:
       batch path   : u, b0_eff, w0_u, [w1, b1, ...], out
       fallback path: u, dxdt,   w0_u, w0_d, b0, [w1, b1, ...], out
    """

    def kernel(*refs):
        o_ref = refs[-1]
        wb = refs[2:-1]

        if batch_bias:
            u_ref, b0_ref = refs[0], refs[1]
            h = jnp.dot(u_ref[...], wb[0][...], preferred_element_type=jnp.float32)
            c1 = h.shape[-1]
            if k == 1:
                h = h + b0_ref[...]                       # (nx, c1) + (1, c1)
            else:
                # Tile rows are k whole batches of nx rows each; nx % 8 == 0, so
                # this reshape is a layout-preserving sublane split.
                h = (h.reshape(k, nx, c1) + b0_ref[...][:, None, :]).reshape(k * nx, c1)
            idx = 1
        else:
            u_ref, dxdt_ref = refs[0], refs[1]
            h = jnp.dot(u_ref[...], wb[0][...], preferred_element_type=jnp.float32)
            h = h + jnp.dot(dxdt_ref[...], wb[1][...], preferred_element_type=jnp.float32)
            h = h + wb[2][...]
            idx = 3

        if n_layers > 1:
            h = jnp.maximum(h, 0.0)

        for i in range(1, n_layers):
            w = wb[idx][...]
            b = wb[idx + 1][...]
            idx += 2
            h = jnp.dot(h, w, preferred_element_type=jnp.float32) + b
            if i < n_layers - 1:                          # ReLU on hidden layers only
                h = jnp.maximum(h, 0.0)

        o_ref[...] = h.astype(o_ref.dtype)

    return kernel


def mlp_pallas(u, dx, dt, weights, biases, *, tile_m: int = 8192):
    """u: [B, nx, th] f32; dx, dt: [B] f32.

    weights[i]: [C_i, C_{i+1}] (C_0 = th + 2), biases[i]: [1, C_{i+1}].
    Returns [B, nx, C_out] f32.
    """
    n_layers = len(weights)
    B, nx, th = u.shape
    M = B * nx
    c1 = weights[0].shape[1]
    c_out = weights[-1].shape[1]

    w0 = weights[0]
    w0_u = w0[:th, :]            # [th, c1]
    w0_d = w0[th:th + 2, :]      # [2,  c1]

    u_flat = u.reshape(M, th)

    # ---- choose tiling / operand set ------------------------------------------
    max_rows = max(8, tile_m)
    # Batch-aligned path: needs nx % 8 == 0 (cheap in-kernel broadcast of the
    # per-batch bias) and a batch-aligned row tile that fits the row budget.
    batch_bias = (nx % 8 == 0) and (M <= max_rows or 8 * nx <= max_rows)

    if batch_bias:
        # dx/dt folded into a per-batch effective first-layer bias (no [M,2] stream).
        b0_eff = (biases[0]
                  + dx[:, None] * w0_d[0][None, :]
                  + dt[:, None] * w0_d[1][None, :]).astype(u.dtype)       # [B, c1]

        if M <= max_rows:
            k = B                                   # one tile covers every batch
        else:
            k = ((max_rows // nx) // 8) * 8         # batches per tile (>= 8)
        B_pad = _round_up(B, k)
        # Prefer >= 2 grid steps so both v7x TensorCores get work.
        while B_pad // k == 1 and k % 16 == 0 and B > k // 2:
            k //= 2
            B_pad = _round_up(B, k)
        tm = k * nx                                 # multiple of 8 (nx % 8 == 0)
        m_pad = B_pad * nx
        grid_m = B_pad // k

        if m_pad != M:
            u_flat = jnp.pad(u_flat, ((0, m_pad - M), (0, 0)))
        if B_pad != B:
            b0_eff = jnp.pad(b0_eff, ((0, B_pad - B), (0, 0)))

        operands = [u_flat, b0_eff, w0_u]
        in_specs = [
            pl.BlockSpec((tm, th), lambda i: (i, 0)),     # row-tiled activations
            pl.BlockSpec((k, c1), lambda i: (i, 0)),      # per-batch effective bias
            pl.BlockSpec(w0_u.shape, lambda g: (0, 0)),   # VMEM-resident weight
        ]
    else:
        # Fallback (nx not a multiple of 8): stream per-row (dx, dt); the concat is
        # still folded into a K=2 matmul and the output stays unpadded.
        dxdt = jnp.concatenate(
            [jnp.broadcast_to(dx[:, None, None], (B, nx, 1)),
             jnp.broadcast_to(dt[:, None, None], (B, nx, 1))], axis=-1,
        ).reshape(M, 2).astype(u.dtype)

        fb_rows = min(max_rows, 6144)               # 3 double-buffered row streams
        tm = max(8, (min(fb_rows, _round_up(M, 8)) // 8) * 8)
        m_pad = _round_up(M, tm)
        if m_pad // tm == 1 and tm > 8 and M > tm // 2:   # >= 2 steps when possible
            tm = max(8, _round_up((tm + 1) // 2, 8))
            m_pad = _round_up(M, tm)
        grid_m = m_pad // tm
        k = 0

        if m_pad != M:
            u_flat = jnp.pad(u_flat, ((0, m_pad - M), (0, 0)))
            dxdt = jnp.pad(dxdt, ((0, m_pad - M), (0, 0)))

        operands = [u_flat, dxdt, w0_u, w0_d, biases[0]]
        in_specs = [
            pl.BlockSpec((tm, th), lambda i: (i, 0)),
            pl.BlockSpec((tm, 2), lambda i: (i, 0)),
            pl.BlockSpec(w0_u.shape, lambda g: (0, 0)),
            pl.BlockSpec(w0_d.shape, lambda g: (0, 0)),
            pl.BlockSpec(biases[0].shape, lambda g: (0, 0)),
        ]

    for li in range(1, n_layers):
        operands += [weights[li], biases[li]]
        in_specs += [pl.BlockSpec(weights[li].shape, lambda g: (0, 0)),
                     pl.BlockSpec(biases[li].shape, lambda g: (0, 0))]

    # Advisory cost estimate (unpadded feature dims).
    flops = 2 * m_pad * th * c1
    for li in range(1, n_layers):
        flops += 2 * m_pad * weights[li].shape[0] * weights[li].shape[1]
    bytes_accessed = 4 * (m_pad * th + m_pad * c_out)
    bytes_accessed += sum(int(w.size) * 4 for w in weights)
    bytes_accessed += sum(int(b.size) * 4 for b in biases)

    out_flat = pl.pallas_call(
        _make_mlp_kernel(n_layers, batch_bias, k, nx),
        out_shape=jax.ShapeDtypeStruct((m_pad, c_out), u.dtype),
        grid=(grid_m,),
        in_specs=in_specs,
        out_specs=pl.BlockSpec((tm, c_out), lambda i: (i, 0)),  # unpadded (masked vst)
        compiler_params=pltpu.CompilerParams(
            dimension_semantics=("parallel",),
            vmem_limit_bytes=32 * 1024 * 1024,
        ),
        cost_estimate=pl.CostEstimate(flops=flops, transcendentals=0,
                                      bytes_accessed=bytes_accessed),
    )(*operands)

    if m_pad != M:
        out_flat = out_flat[:M]
    return out_flat.reshape(B, nx, c_out)


class MLPPallas:
    """JAX/Pallas re-implementation of the sympde MLP module."""

    def __init__(self, time_history, time_future, hidden_channels, key):
        self.time_history = time_history
        self.time_future = time_future
        channels = list(hidden_channels) + [time_future]
        dims = [time_history + 2] + channels

        self.weights = []
        self.biases = []
        for i in range(len(channels)):
            fan_in, fan_out = dims[i], dims[i + 1]
            key, wk, bk = jax.random.split(key, 3)
            # Deterministic Kaiming-uniform-ish init (matches torch.nn.Linear ranges).
            bound = 1.0 / jnp.sqrt(jnp.float32(fan_in))
            w = jax.random.uniform(wk, (fan_in, fan_out), jnp.float32, -bound, bound)
            b = jax.random.uniform(bk, (1, fan_out), jnp.float32, -bound, bound)
            self.weights.append(w)
            self.biases.append(b)

    def __call__(self, u, dx, dt):
        # u: [B, nx, time_history], dx: [B], dt: [B]
        return mlp_pallas(u, dx, dt, self.weights, self.biases)


def _reference_forward(model, u, dx, dt):
    """Plain-JAX reference (mirrors the PyTorch module) for a sanity check."""
    B, nx, th = u.shape
    x = jnp.concatenate(
        [u,
         jnp.broadcast_to(dx[:, None, None], (B, nx, 1)),
         jnp.broadcast_to(dt[:, None, None], (B, nx, 1))], axis=-1)
    h = x.reshape(B * nx, -1)
    n = len(model.weights)
    for i, (w, b) in enumerate(zip(model.weights, model.biases)):
        h = h @ w + b
        if i < n - 1:
            h = jnp.maximum(h, 0.0)
    return h.reshape(B, nx, model.time_future)


if __name__ == "__main__":
    key = jax.random.PRNGKey(0)

    # Small, module-consistent shapes.
    batch = 2
    nx = 16
    time_history = 4
    time_future = 3
    hidden_channels = [32, 32]

    key, ku, kdx, kdt, kparam = jax.random.split(key, 5)
    u = jax.random.normal(ku, (batch, nx, time_history), jnp.float32)
    dx = jax.random.uniform(kdx, (batch,), jnp.float32, 0.01, 0.1)
    dt = jax.random.uniform(kdt, (batch,), jnp.float32, 0.01, 0.1)

    model = MLPPallas(time_history, time_future, hidden_channels, kparam)

    # Primary path (nx % 8 == 0): per-batch effective bias, no dxdt stream.
    out = jax.block_until_ready(model(u, dx, dt))
    ref = _reference_forward(model, u, dx, dt)
    assert out.shape == (batch, nx, time_future), out.shape
    assert jnp.allclose(out, ref, atol=1e-4, rtol=1e-4), "mismatch vs reference (batch path)"

    # Fallback path (nx % 8 != 0): per-row (dx, dt) stream + row padding.
    batch2, nx2 = 3, 12
    key, ku2, kdx2, kdt2 = jax.random.split(key, 4)
    u2 = jax.random.normal(ku2, (batch2, nx2, time_history), jnp.float32)
    dx2 = jax.random.uniform(kdx2, (batch2,), jnp.float32, 0.01, 0.1)
    dt2 = jax.random.uniform(kdt2, (batch2,), jnp.float32, 0.01, 0.1)
    out2 = jax.block_until_ready(model(u2, dx2, dt2))
    ref2 = _reference_forward(model, u2, dx2, dt2)
    assert out2.shape == (batch2, nx2, time_future), out2.shape
    assert jnp.allclose(out2, ref2, atol=1e-4, rtol=1e-4), "mismatch vs reference (fallback path)"

    print("KERNEL_OK")
</pallas_src>

<mosaic_0001>
module attributes {stable_mosaic.version = 11 : i64} {
  func.func @kernel(%arg0: i32, %arg1: memref<32x4xf32, #tpu.memory_space<vmem>>, %arg2: memref<2x32xf32, #tpu.memory_space<vmem>>, %arg3: memref<4x32xf32, #tpu.memory_space<vmem>>, %arg4: memref<32x32xf32, #tpu.memory_space<vmem>>, %arg5: memref<1x32xf32, #tpu.memory_space<vmem>>, %arg6: memref<32x3xf32, #tpu.memory_space<vmem>>, %arg7: memref<1x3xf32, #tpu.memory_space<vmem>>, %arg8: memref<32x3xf32, #tpu.memory_space<vmem>>) attributes {dimension_semantics = [#tpu.dimension_semantics<parallel>], iteration_bounds = array<i64: 1>, scalar_prefetch = 0 : i64, scratch_operands = 0 : i64, tpu.core_type = #tpu.core_type<tc>, window_params = [{transform_indices = @transform_0, window_bounds = array<i64: 32, 4>}, {transform_indices = @transform_1, window_bounds = array<i64: 2, 32>}, {pipeline_mode = #tpu.pipeline_mode<synchronous>, transform_indices = @transform_2, window_bounds = array<i64: 4, 32>}, {pipeline_mode = #tpu.pipeline_mode<synchronous>, transform_indices = @transform_3, window_bounds = array<i64: 32, 32>}, {pipeline_mode = #tpu.pipeline_mode<synchronous>, transform_indices = @transform_4, window_bounds = array<i64: 1, 32>}, {pipeline_mode = #tpu.pipeline_mode<synchronous>, transform_indices = @transform_5, window_bounds = array<i64: 32, 3>}, {pipeline_mode = #tpu.pipeline_mode<synchronous>, transform_indices = @transform_6, window_bounds = array<i64: 1, 3>}, {transform_indices = @transform_7, window_bounds = array<i64: 32, 3>}]} {
    %c0 = arith.constant 0 : index
    %c0_0 = arith.constant 0 : index
    %0 = vector.load %arg1[%c0, %c0_0] : memref<32x4xf32, #tpu.memory_space<vmem>>, vector<32x4xf32>
    %c0_1 = arith.constant 0 : index
    %c0_2 = arith.constant 0 : index
    %1 = vector.load %arg3[%c0_1, %c0_2] : memref<4x32xf32, #tpu.memory_space<vmem>>, vector<4x32xf32>
    %cst = arith.constant dense<0.000000e+00> : vector<32x32xf32>
    %2 = tpu.matmul %0, %1, %cst {dimension_numbers = #tpu.dot_dimension_numbers<[1], [0], [0], [1], [0, 0, 1, 1], [], []>} : vector<32x4xf32>, vector<4x32xf32>, vector<32x32xf32> -> vector<32x32xf32>
    %3 = vector.shape_cast %2 : vector<32x32xf32> to vector<2x16x32xf32>
    %c0_3 = arith.constant 0 : index
    %c0_4 = arith.constant 0 : index
    %4 = vector.load %arg2[%c0_3, %c0_4] : memref<2x32xf32, #tpu.memory_space<vmem>>, vector<2x32xf32>
    %5 = vector.shape_cast %4 : vector<2x32xf32> to vector<2x1x32xf32>
    %6 = vector.broadcast %5 : vector<2x1x32xf32> to vector<2x16x32xf32>
    %7 = arith.addf %3, %6 : vector<2x16x32xf32>
    %8 = vector.shape_cast %7 : vector<2x16x32xf32> to vector<32x32xf32>
    %cst_5 = arith.constant 0.000000e+00 : f32
    %9 = vector.broadcast %cst_5 : f32 to vector<32x32xf32>
    %10 = arith.maximumf %8, %9 : vector<32x32xf32>
    %c0_6 = arith.constant 0 : index
    %c0_7 = arith.constant 0 : index
    %11 = vector.load %arg4[%c0_6, %c0_7] : memref<32x32xf32, #tpu.memory_space<vmem>>, vector<32x32xf32>
    %c0_8 = arith.constant 0 : index
    %c0_9 = arith.constant 0 : index
    %12 = vector.load %arg5[%c0_8, %c0_9] : memref<1x32xf32, #tpu.memory_space<vmem>>, vector<1x32xf32>
    %cst_10 = arith.constant dense<0.000000e+00> : vector<32x32xf32>
    %13 = tpu.matmul %10, %11, %cst_10 {dimension_numbers = #tpu.dot_dimension_numbers<[1], [0], [0], [1], [0, 0, 1, 1], [], []>} : vector<32x32xf32>, vector<32x32xf32>, vector<32x32xf32> -> vector<32x32xf32>
    %14 = vector.broadcast %12 : vector<1x32xf32> to vector<32x32xf32>
    %15 = arith.addf %13, %14 : vector<32x32xf32>
    %cst_11 = arith.constant 0.000000e+00 : f32
    %16 = vector.broadcast %cst_11 : f32 to vector<32x32xf32>
    %17 = arith.maximumf %15, %16 : vector<32x32xf32>
    %c0_12 = arith.constant 0 : index
    %c0_13 = arith.constant 0 : index
    %18 = vector.load %arg6[%c0_12, %c0_13] : memref<32x3xf32, #tpu.memory_space<vmem>>, vector<32x3xf32>
    %c0_14 = arith.constant 0 : index
    %c0_15 = arith.constant 0 : index
    %19 = vector.load %arg7[%c0_14, %c0_15] : memref<1x3xf32, #tpu.memory_space<vmem>>, vector<1x3xf32>
    %cst_16 = arith.constant dense<0.000000e+00> : vector<32x3xf32>
    %20 = tpu.matmul %17, %18, %cst_16 {dimension_numbers = #tpu.dot_dimension_numbers<[1], [0], [0], [1], [0, 0, 1, 1], [], []>} : vector<32x32xf32>, vector<32x3xf32>, vector<32x3xf32> -> vector<32x3xf32>
    %21 = vector.broadcast %19 : vector<1x3xf32> to vector<32x3xf32>
    %22 = arith.addf %20, %21 : vector<32x3xf32>
    %c0_17 = arith.constant 0 : index
    %c0_18 = arith.constant 0 : index
    %23 = vector.load %arg8[%c0_17, %c0_18] : memref<32x3xf32, #tpu.memory_space<vmem>>, vector<32x3xf32>
    tpu.vector_store %arg8[%c0_17, %c0_18], %22 {strides = array<i32>} : memref<32x3xf32, #tpu.memory_space<vmem>>, vector<32x3xf32>,
    return
  }
  func.func @transform_0(%arg0: i32) -> (i32, i32) {
    %c0_i32 = arith.constant 0 : i32
    %c0_i32_0 = arith.constant 0 : i32
    return %arg0, %c0_i32 : i32, i32
  }
  func.func @transform_1(%arg0: i32) -> (i32, i32) {
    %c0_i32 = arith.constant 0 : i32
    %c0_i32_0 = arith.constant 0 : i32
    return %arg0, %c0_i32 : i32, i32
  }
  func.func @transform_2(%arg0: i32) -> (i32, i32) {
    %c0_i32 = arith.constant 0 : i32
    %c0_i32_0 = arith.constant 0 : i32
    %c0_i32_1 = arith.constant 0 : i32
    return %c0_i32, %c0_i32_0 : i32, i32
  }
  func.func @transform_3(%arg0: i32) -> (i32, i32) {
    %c0_i32 = arith.constant 0 : i32
    %c0_i32_0 = arith.constant 0 : i32
    %c0_i32_1 = arith.constant 0 : i32
    return %c0_i32, %c0_i32_0 : i32, i32
  }
  func.func @transform_4(%arg0: i32) -> (i32, i32) {
    %c0_i32 = arith.constant 0 : i32
    %c0_i32_0 = arith.constant 0 : i32
    %c0_i32_1 = arith.constant 0 : i32
    return %c0_i32, %c0_i32_0 : i32, i32
  }
  func.func @transform_5(%arg0: i32) -> (i32, i32) {
    %c0_i32 = arith.constant 0 : i32
    %c0_i32_0 = arith.constant 0 : i32
    %c0_i32_1 = arith.constant 0 : i32
    return %c0_i32, %c0_i32_0 : i32, i32
  }
  func.func @transform_6(%arg0: i32) -> (i32, i32) {
    %c0_i32 = arith.constant 0 : i32
    %c0_i32_0 = arith.constant 0 : i32
    %c0_i32_1 = arith.constant 0 : i32
    return %c0_i32, %c0_i32_0 : i32, i32
  }
  func.func @transform_7(%arg0: i32) -> (i32, i32) {
    %c0_i32 = arith.constant 0 : i32
    %c0_i32_0 = arith.constant 0 : i32
    return %arg0, %c0_i32 : i32, i32
  }
}

</mosaic_0001>

<llo_original>
// kernel: tpu_custom_call.1
$region0: #{tpu_custom_call.1}
  #allocation0 [shape = 'u32[]', space=smem, size = 0x4, offset = 0x4, fixed_abs, tag = 'smem constant byte address 0x4 - core index']
  #allocation1 [shape = 'u32[144,128]{1,0:T(1,128)}', space=vmem, size = 0x12000, scoped, tag = 'internal scratch']
  %s0 = inlined_call_operand.vmem [shape: f32[32,4], index: 0, kind: input, shape index: {}]
  %s1 = inlined_call_operand.vmem [shape: f32[2,32], index: 1, kind: input, shape index: {}]
  %s2 = inlined_call_operand.vmem [shape: f32[4,32], index: 2, kind: input, shape index: {}]
  %s3 = inlined_call_operand.vmem [shape: f32[32,32], index: 3, kind: input, shape index: {}]
  %s4 = inlined_call_operand.vmem [shape: f32[1,32], index: 4, kind: input, shape index: {}]
  %s5 = inlined_call_operand.vmem [shape: f32[32,3], index: 5, kind: input, shape index: {}]
  %s6 = inlined_call_operand.vmem [shape: f32[1,3], index: 6, kind: input, shape index: {}]
  %s7 = inlined_call_operand.vmem [shape: f32[32,3], index: 7, kind: output, shape index: {}]
  %s8 = sld [smem:[#allocation0]]
  $region38: #{tpu_custom_call.1} parent=0
    _
  %s10 = ssub.s32 1, %s8
  %s11 = scalar_select 0, %s10, %s8
  // Predicated region
  $region2: #{tpu_custom_call.1} parent=0 // pred_check
    _
  $region3: #{tpu_custom_call.1} parent=0 // pred_check_branch
    %13 = sbr.rel (0) target = $region5
  $region4: #{tpu_custom_call.1} parent=0 // pred_region
    _
  $region5: #{tpu_custom_call.1} parent=0 // pred_fallthru
    _
  // Predicated region
  $region6: #{tpu_custom_call.1} parent=0 // pred_check
    _
  $region7: #{tpu_custom_call.1} parent=0 // pred_check_branch
    %15 = sbr.rel (0) target = $region9
  $region8: #{tpu_custom_call.1} parent=0 // pred_region
    _
  $region9: #{tpu_custom_call.1} parent=0 // pred_fallthru
    _
  // Predicated region
  $region10: #{tpu_custom_call.1} parent=0 // pred_check
    _
  $region11: #{tpu_custom_call.1} parent=0 // pred_check_branch
    %17 = sbr.rel (0) target = $region13
  $region12: #{tpu_custom_call.1} parent=0 // pred_region
    _
  $region13: #{tpu_custom_call.1} parent=0 // pred_fallthru
    _
  // Predicated region
  $region14: #{tpu_custom_call.1} parent=0 // pred_check
    _
  $region15: #{tpu_custom_call.1} parent=0 // pred_check_branch
    %19 = sbr.rel (0) target = $region17
  $region16: #{tpu_custom_call.1} parent=0 // pred_region
    _
  $region17: #{tpu_custom_call.1} parent=0 // pred_fallthru
    _
  // Predicated region
  $region18: #{tpu_custom_call.1} parent=0 // pred_check
    _
  $region19: #{tpu_custom_call.1} parent=0 // pred_check_branch
    %21 = sbr.rel (0) target = $region21
  $region20: #{tpu_custom_call.1} parent=0 // pred_region
    _
  $region21: #{tpu_custom_call.1} parent=0 // pred_fallthru
    _
  // Predicated region
  $region22: #{tpu_custom_call.1} parent=0 // pred_check
    _
  $region23: #{tpu_custom_call.1} parent=0 // pred_check_branch
    %23 = sbr.rel (0) target = $region25
  $region24: #{tpu_custom_call.1} parent=0 // pred_region
    _
  $region25: #{tpu_custom_call.1} parent=0 // pred_fallthru
    _
  // Predicated region
  $region26: #{tpu_custom_call.1} parent=0 // pred_check
    _
  $region27: #{tpu_custom_call.1} parent=0 // pred_check_branch
    %25 = sbr.rel (0) target = $region29
  $region28: #{tpu_custom_call.1} parent=0 // pred_region
    _
  $region29: #{tpu_custom_call.1} parent=0 // pred_fallthru
    _
  %v26 = vld [vmem:[%s0] sm:$0xff]
  %v27 = vld [vmem:[%s0 + $0x8] sm:$0xff]
  %v28 = vld [vmem:[%s0 + $0x10] sm:$0xff]
  %v29 = vld [vmem:[%s0 + $0x18] sm:$0xff]
  %v30 = vld [vmem:[%s2] sm:$0xf]
  %vm31 = vcmask 31744
  %v33 = vsel %vm31, %v26, 0
  %v36 = vsel %vm31, %v27, 0
  %v39 = vsel %vm31, %v28, 0
  %v42 = vsel %vm31, %v29, 0
  %vm44 = vcmask 1043456
  %v46 = vsel %vm44, %v30, 0
  %48 = vmatprep.subr.mxu0 0.0
  %49 = vmatpush1.msra.mxu0 %v46
  %50 = vmatprep.subr.mxu0 0.0
  %51 = vmatpush1.msra.mxu0 0.0
  %52 = vmatprep.subr.mxu0 0.0
  %53 = vmatpush1.msra.mxu0 0.0
  %54 = vmatprep.subr.mxu0 0.0
  %55 = vmatpush1.msra.mxu0 0.0
  %56 = vmatprep.subr.mxu0 0.0
  %57 = vmatpush1.msra.mxu0 0.0
  %58 = vmatprep.subr.mxu0 0.0
  %59 = vmatpush1.msra.mxu0 0.0
  %60 = vmatprep.subr.mxu0 0.0
  %61 = vmatpush1.msra.mxu0 0.0
  %62 = vmatprep.subr.mxu0 0.0
  %63 = vmatpush1.msra.mxu0 0.0
  %64 = vmatprep.subr.mxu0 0.0
  %65 = vmatpush1.msra.mxu0 0.0
  %66 = vmatprep.subr.mxu0 0.0
  %67 = vmatpush1.msra.mxu0 0.0
  %68 = vmatprep.subr.mxu0 0.0
  %69 = vmatpush1.msra.mxu0 0.0
  %70 = vmatprep.subr.mxu0 0.0
  %71 = vmatpush1.msra.mxu0 0.0
  %72 = vmatprep.subr.mxu0 0.0
  %73 = vmatpush1.msra.mxu0 0.0
  %74 = vmatprep.subr.mxu0 0.0
  %75 = vmatpush1.msra.mxu0 0.0
  %76 = vmatprep.subr.mxu0 0.0
  %77 = vmatpush1.msra.mxu0 0.0
  %78 = vmatprep.subr.mxu0 0.0
  %79 = vmatpush1.msra.mxu0 0.0
  %80 = vmatprep.subr.mxu0 0.0
  %81 = vmatpush1.msra.mxu0 0.0
  %82 = vmatprep.subr.mxu0 0.0
  %83 = vmatpush1.msra.mxu0 0.0
  %84 = vmatprep.subr.mxu0 0.0
  %85 = vmatpush1.msra.mxu0 0.0
  %86 = vmatprep.subr.mxu0 0.0
  %87 = vmatpush1.msra.mxu0 0.0
  %88 = vmatprep.subr.mxu0 0.0
  %89 = vmatpush1.msra.mxu0 0.0
  %90 = vmatprep.subr.mxu0 0.0
  %91 = vmatpush1.msra.mxu0 0.0
  %92 = vmatprep.subr.mxu0 0.0
  %93 = vmatpush1.msra.mxu0 0.0
  %94 = vmatprep.subr.mxu0 0.0
  %95 = vmatpush1.msra.mxu0 0.0
  %96 = vmatprep.subr.mxu0 0.0
  %97 = vmatpush1.msra.mxu0 0.0
  %98 = vmatprep.subr.mxu0 0.0
  %99 = vmatpush1.msra.mxu0 0.0
  %100 = vmatprep.subr.mxu0 0.0
  %101 = vmatpush1.msra.mxu0 0.0
  %102 = vmatprep.subr.mxu0 0.0
  %103 = vmatpush1.msra.mxu0 0.0
  %104 = vmatprep.subr.mxu0 0.0
  %105 = vmatpush1.msra.mxu0 0.0
  %106 = vmatprep.subr.mxu0 0.0
  %107 = vmatpush1.msra.mxu0 0.0
  %108 = vmatprep.subr.mxu0 0.0
  %109 = vmatpush1.msra.mxu0 0.0
  %110 = vmatprep.subr.mxu0 0.0
  %111 = vmatpush1.msra.mxu0 0.0
  %112 = vmatprep.mubr.f32.mxu0 0.0
  %113 = vmatmul.mubr.f32.gmra.mrb[0].mxu0 %v33
  %v114 = vpop.f32.mrb[0].mxu0
  %v115 = vadd.f32 0.0, %v114
  %v116 = vpop.f32.mrb[0].mxu0
  %117 = vmatprep.mubr.f32.mxu0 0.0
  %118 = vmatmul.mubr.f32.gmra.mrb[0].mxu0 %v36
  %v119 = vpop.f32.mrb[0].mxu0
  %v120 = vadd.f32 0.0, %v119
  %v121 = vpop.f32.mrb[0].mxu0
  %122 = vmatprep.mubr.f32.mxu0 0.0
  %123 = vmatmul.mubr.f32.gmra.mrb[0].mxu0 %v39
  %v124 = vpop.f32.mrb[0].mxu0
  %v125 = vadd.f32 0.0, %v124
  %v126 = vpop.f32.mrb[0].mxu0
  %127 = vmatprep.mubr.f32.mxu0 0.0
  %128 = vmatmul.mubr.f32.gmra.mrb[0].mxu0 %v42
  %v129 = vpop.f32.mrb[0].mxu0
  %v130 = vadd.f32 0.0, %v129
  %v131 = vpop.f32.mrb[0].mxu0
  %132 = vdwg.mxu0
  %v133 = vld [vmem:[%s1] sm:$0x3]
  %v136 = vunpack.c.l.s4 1966171168
  %v137 = vunpack.c.0.s8 %v136
  %v138 = vlaneseq
  %v139 = vshrl.u32 %v138, 7
  %v140 = vsub.s32 %v137, %v139
  %v141 = vrot.slane %v133, %v140
  %v142 = vcombine.high %v141, %v141
  %v144 = vunpack.c.l.s4 1966171168
  %v145 = vunpack.c.0.s8 %v144
  %v146 = vlaneseq
  %v147 = vshrl.u32 %v146, 7
  %v148 = vsub.s32 %v145, %v147
  %v149 = vrot.slane %v141, %v148
  %v151 = vunpack.c.l.s4 1966171168
  %v152 = vunpack.c.0.s8 %v151
  %v153 = vlaneseq
  %v154 = vshrl.u32 %v153, 7
  %v155 = vsub.s32 %v152, %v154
  %v156 = vrot.slane %v142, %v155
  %v157 = vlaneseq
  %v158 = vshrl.u32 %v157, 7
  %v159 = vsub.s32 0, %v158
  %v160 = vrot.slane %v149, %v159
  %v161 = vlaneseq
  %v162 = vshrl.u32 %v161, 7
  %v163 = vsub.s32 0, %v162
  %v164 = vrot.slane %v156, %v163
  %v167 = vadd.f32 %v115, %v160
  %v168 = vadd.f32 %v120, %v160
  %v169 = vadd.f32 %v125, %v164
  %v170 = vadd.f32 %v130, %v164
  %v171 = vmax.f32 %v167, 0.0
  %v172 = vmax.f32 %v168, 0.0
  %v173 = vmax.f32 %v169, 0.0
  %v174 = vmax.f32 %v170, 0.0
  %v175 = vld [vmem:[%s3] sm:$0xff]
  %v176 = vld [vmem:[%s3 + $0x8] sm:$0xff]
  %v177 = vld [vmem:[%s3 + $0x10] sm:$0xff]
  %v178 = vld [vmem:[%s3 + $0x18] sm:$0xff]
  %v179 = vld [vmem:[%s4] sm:$0x1]
  %v181 = vlaneseq
  %v182 = vshrl.u32 %v181, 7
  %v183 = vsub.s32 0, %v182
  %v184 = vrot.slane %v179, %v183
  %vm186 = vcmask 261120
  %v188 = vsel %vm186, %v171, 0
  %v191 = vsel %vm186, %v172, 0
  %v194 = vsel %vm186, %v173, 0
  %v197 = vsel %vm186, %v174, 0
  %199 = vmatprep.subr.mxu0 0.0
  %200 = vmatpush1.msra.mxu0 %v175
  %201 = vmatprep.subr.mxu0 0.0
  %202 = vmatpush1.msra.mxu0 %v176
  %203 = vmatprep.subr.mxu0 0.0
  %204 = vmatpush1.msra.mxu0 %v177
  %205 = vmatprep.subr.mxu0 0.0
  %206 = vmatpush1.msra.mxu0 %v178
  %207 = vmatprep.subr.mxu0 0.0
  %208 = vmatpush1.msra.mxu0 0.0
  %209 = vmatprep.subr.mxu0 0.0
  %210 = vmatpush1.msra.mxu0 0.0
  %211 = vmatprep.subr.mxu0 0.0
  %212 = vmatpush1.msra.mxu0 0.0
  %213 = vmatprep.subr.mxu0 0.0
  %214 = vmatpush1.msra.mxu0 0.0
  %215 = vmatprep.subr.mxu0 0.0
  %216 = vmatpush1.msra.mxu0 0.0
  %217 = vmatprep.subr.mxu0 0.0
  %218 = vmatpush1.msra.mxu0 0.0
  %219 = vmatprep.subr.mxu0 0.0
  %220 = vmatpush1.msra.mxu0 0.0
  %221 = vmatprep.subr.mxu0 0.0
  %222 = vmatpush1.msra.mxu0 0.0
  %223 = vmatprep.subr.mxu0 0.0
  %224 = vmatpush1.msra.mxu0 0.0
  %225 = vmatprep.subr.mxu0 0.0
  %226 = vmatpush1.msra.mxu0 0.0
  %227 = vmatprep.subr.mxu0 0.0
  %228 = vmatpush1.msra.mxu0 0.0
  %229 = vmatprep.subr.mxu0 0.0
  %230 = vmatpush1.msra.mxu0 0.0
  %231 = vmatprep.subr.mxu0 0.0
  %232 = vmatpush1.msra.mxu0 0.0
  %233 = vmatprep.subr.mxu0 0.0
  %234 = vmatpush1.msra.mxu0 0.0
  %235 = vmatprep.subr.mxu0 0.0
  %236 = vmatpush1.msra.mxu0 0.0
  %237 = vmatprep.subr.mxu0 0.0
  %238 = vmatpush1.msra.mxu0 0.0
  %239 = vmatprep.subr.mxu0 0.0
  %240 = vmatpush1.msra.mxu0 0.0
  %241 = vmatprep.subr.mxu0 0.0
  %242 = vmatpush1.msra.mxu0 0.0
  %243 = vmatprep.subr.mxu0 0.0
  %244 = vmatpush1.msra.mxu0 0.0
  %245 = vmatprep.subr.mxu0 0.0
  %246 = vmatpush1.msra.mxu0 0.0
  %247 = vmatprep.subr.mxu0 0.0
  %248 = vmatpush1.msra.mxu0 0.0
  %249 = vmatprep.subr.mxu0 0.0
  %250 = vmatpush1.msra.mxu0 0.0
  %251 = vmatprep.subr.mxu0 0.0
  %252 = vmatpush1.msra.mxu0 0.0
  %253 = vmatprep.subr.mxu0 0.0
  %254 = vmatpush1.msra.mxu0 0.0
  %255 = vmatprep.subr.mxu0 0.0
  %256 = vmatpush1.msra.mxu0 0.0
  %257 = vmatprep.subr.mxu0 0.0
  %258 = vmatpush1.msra.mxu0 0.0
  %259 = vmatprep.subr.mxu0 0.0
  %260 = vmatpush1.msra.mxu0 0.0
  %261 = vmatprep.subr.mxu0 0.0
  %262 = vmatpush1.msra.mxu0 0.0
  %263 = vmatprep.mubr.f32.mxu0 0.0
  %264 = vmatmul.mubr.f32.gmra.mrb[0].mxu0 %v188
  %v265 = vpop.f32.mrb[0].mxu0
  %v266 = vadd.f32 %v184, %v265
  %v267 = vpop.f32.mrb[0].mxu0
  %268 = vmatprep.mubr.f32.mxu0 0.0
  %269 = vmatmul.mubr.f32.gmra.mrb[0].mxu0 %v191
  %v270 = vpop.f32.mrb[0].mxu0
  %v271 = vadd.f32 %v184, %v270
  %v272 = vpop.f32.mrb[0].mxu0
  %273 = vmatprep.mubr.f32.mxu0 0.0
  %274 = vmatmul.mubr.f32.gmra.mrb[0].mxu0 %v194
  %v275 = vpop.f32.mrb[0].mxu0
  %v276 = vadd.f32 %v184, %v275
  %v277 = vpop.f32.mrb[0].mxu0
  %278 = vmatprep.mubr.f32.mxu0 0.0
  %279 = vmatmul.mubr.f32.gmra.mrb[0].mxu0 %v197
  %v280 = vpop.f32.mrb[0].mxu0
  %v281 = vadd.f32 %v184, %v280
  %v282 = vpop.f32.mrb[0].mxu0
  %283 = vdwg.mxu0
  %v284 = vmax.f32 %v266, 0.0
  %v285 = vmax.f32 %v271, 0.0
  %v286 = vmax.f32 %v276, 0.0
  %v287 = vmax.f32 %v281, 0.0
  %v288 = vld [vmem:[%s5] sm:$0xff]
  %v289 = vld [vmem:[%s5 + $0x8] sm:$0xff]
  %v290 = vld [vmem:[%s5 + $0x10] sm:$0xff]
  %v291 = vld [vmem:[%s5 + $0x18] sm:$0xff]
  %v292 = vld [vmem:[%s6] sm:$0x1]
  %v294 = vlaneseq
  %v295 = vshrl.u32 %v294, 7
  %v296 = vsub.s32 0, %v295
  %v297 = vrot.slane %v292, %v296
  %v300 = vsel %vm186, %v284, 0
  %v303 = vsel %vm186, %v285, 0
  %v306 = vsel %vm186, %v286, 0
  %v309 = vsel %vm186, %v287, 0
  %311 = vmatprep.subr.mxu0 0.0
  %312 = vmatpush1.msra.mxu0 %v288
  %313 = vmatprep.subr.mxu0 0.0
  %314 = vmatpush1.msra.mxu0 %v289
  %315 = vmatprep.subr.mxu0 0.0
  %316 = vmatpush1.msra.mxu0 %v290
  %317 = vmatprep.subr.mxu0 0.0
  %318 = vmatpush1.msra.mxu0 %v291
  %319 = vmatprep.subr.mxu0 0.0
  %320 = vmatpush1.msra.mxu0 0.0
  %321 = vmatprep.subr.mxu0 0.0
  %322 = vmatpush1.msra.mxu0 0.0
  %323 = vmatprep.subr.mxu0 0.0
  %324 = vmatpush1.msra.mxu0 0.0
  %325 = vmatprep.subr.mxu0 0.0
  %326 = vmatpush1.msra.mxu0 0.0
  %327 = vmatprep.subr.mxu0 0.0
  %328 = vmatpush1.msra.mxu0 0.0
  %329 = vmatprep.subr.mxu0 0.0
  %330 = vmatpush1.msra.mxu0 0.0
  %331 = vmatprep.subr.mxu0 0.0
  %332 = vmatpush1.msra.mxu0 0.0
  %333 = vmatprep.subr.mxu0 0.0
  %334 = vmatpush1.msra.mxu0 0.0
  %335 = vmatprep.subr.mxu0 0.0
  %336 = vmatpush1.msra.mxu0 0.0
  %337 = vmatprep.subr.mxu0 0.0
  %338 = vmatpush1.msra.mxu0 0.0
  %339 = vmatprep.subr.mxu0 0.0
  %340 = vmatpush1.msra.mxu0 0.0
  %341 = vmatprep.subr.mxu0 0.0
  %342 = vmatpush1.msra.mxu0 0.0
  %343 = vmatprep.subr.mxu0 0.0
  %344 = vmatpush1.msra.mxu0 0.0
  %345 = vmatprep.subr.mxu0 0.0
  %346 = vmatpush1.msra.mxu0 0.0
  %347 = vmatprep.subr.mxu0 0.0
  %348 = vmatpush1.msra.mxu0 0.0
  %349 = vmatprep.subr.mxu0 0.0
  %350 = vmatpush1.msra.mxu0 0.0
  %351 = vmatprep.subr.mxu0 0.0
  %352 = vmatpush1.msra.mxu0 0.0
  %353 = vmatprep.subr.mxu0 0.0
  %354 = vmatpush1.msra.mxu0 0.0
  %355 = vmatprep.subr.mxu0 0.0
  %356 = vmatpush1.msra.mxu0 0.0
  %357 = vmatprep.subr.mxu0 0.0
  %358 = vmatpush1.msra.mxu0 0.0
  %359 = vmatprep.subr.mxu0 0.0
  %360 = vmatpush1.msra.mxu0 0.0
  %361 = vmatprep.subr.mxu0 0.0
  %362 = vmatpush1.msra.mxu0 0.0
  %363 = vmatprep.subr.mxu0 0.0
  %364 = vmatpush1.msra.mxu0 0.0
  %365 = vmatprep.subr.mxu0 0.0
  %366 = vmatpush1.msra.mxu0 0.0
  %367 = vmatprep.subr.mxu0 0.0
  %368 = vmatpush1.msra.mxu0 0.0
  %369 = vmatprep.subr.mxu0 0.0
  %370 = vmatpush1.msra.mxu0 0.0
  %371 = vmatprep.subr.mxu0 0.0
  %372 = vmatpush1.msra.mxu0 0.0
  %373 = vmatprep.subr.mxu0 0.0
  %374 = vmatpush1.msra.mxu0 0.0
  %375 = vmatprep.mubr.f32.mxu0 0.0
  %376 = vmatmul.mubr.f32.gmra.mrb[0].mxu0 %v300
  %v377 = vpop.f32.mrb[0].mxu0
  %v378 = vadd.f32 %v297, %v377
  %v379 = vpop.f32.mrb[0].mxu0
  %380 = vmatprep.mubr.f32.mxu0 0.0
  %381 = vmatmul.mubr.f32.gmra.mrb[0].mxu0 %v303
  %v382 = vpop.f32.mrb[0].mxu0
  %v383 = vadd.f32 %v297, %v382
  %v384 = vpop.f32.mrb[0].mxu0
  %385 = vmatprep.mubr.f32.mxu0 0.0
  %386 = vmatmul.mubr.f32.gmra.mrb[0].mxu0 %v306
  %v387 = vpop.f32.mrb[0].mxu0
  %v388 = vadd.f32 %v297, %v387
  %v389 = vpop.f32.mrb[0].mxu0
  %390 = vmatprep.mubr.f32.mxu0 0.0
  %391 = vmatmul.mubr.f32.gmra.mrb[0].mxu0 %v309
  %v392 = vpop.f32.mrb[0].mxu0
  %v393 = vadd.f32 %v297, %v392
  %v394 = vpop.f32.mrb[0].mxu0
  %395 = vdwg.mxu0
  %vm396 = vcmask 23552
  %397 = vst.msk [vmem:[%s7] sm:$0xff] %vm396, %v378
  %398 = vst.msk [vmem:[%s7 + $0x8] sm:$0xff] %vm396, %v383
  %399 = vst.msk [vmem:[%s7 + $0x10] sm:$0xff] %vm396, %v388
  %400 = vst.msk [vmem:[%s7 + $0x18] sm:$0xff] %vm396, %v393
  // Predicated region
  $region30: #{tpu_custom_call.1} parent=0 // pred_check
    _
  $region31: #{tpu_custom_call.1} parent=0 // pred_check_branch
    %402 = sbr.rel (0) target = $region33
  $region32: #{tpu_custom_call.1} parent=0 // pred_region
    _
  $region33: #{tpu_custom_call.1} parent=0 // pred_fallthru
    _
  // Predicated region
  $region34: #{tpu_custom_call.1} parent=0 // pred_check
    _
  $region35: #{tpu_custom_call.1} parent=0 // pred_check_branch
    %404 = sbr.rel (0) target = $region37
  $region36: #{tpu_custom_call.1} parent=0 // pred_region
    _
  $region37: #{tpu_custom_call.1} parent=0 // pred_fallthru
    _

</llo_original>
